<compile_context>
chip_gen: v7x
topology: tpu7x:2x2x1
jax: 0.10.0
libtpu: 0.0.40
codegen_flags: <defaults>
</compile_context>

<pallas_src>
import jax
import jax.numpy as jnp
from jax.experimental import pallas as pl
from jax.experimental.pallas import tpu as pltpu

LANES = 128  # native lane width


def critic_kernel(x_ref, w1_ref, b1_ref, w2_ref, b2_ref, o_ref):
    # fc1 on the MXU, f32 accumulate: (TB, S) @ (S, 128) -> (TB, 128)
    h = jnp.dot(x_ref[...], w1_ref[...], preferred_element_type=jnp.float32)
    # fused bias + ReLU in one VPU pass (padded lanes stay at relu(0)=0)
    h = jnp.maximum(h + b1_ref[...], 0.0)
    # fc2 as a lane reduction on VPU/XLU (w2 row is zero in the padded lanes,
    # so padded columns contribute nothing). Avoids an N=1 MXU matmul.
    v = jnp.sum(h * w2_ref[...], axis=-1, keepdims=True)       # (TB, 1)
    o_ref[...] = (v + b2_ref[...]).astype(o_ref.dtype)


def critic_forward(x, w1, b1, w2, b2, *, tb=1024):
    """x: (B, S) f32; w1: (S, 16); b1: (16,); w2: (16, 1); b2: (1,).

    tb: batch tile (rows per grid step). 1024 rows of S=32 f32 is ~128 KiB per
    buffer -> comfortably under scoped VMEM on v5e/v6e/v7x; raise on v5e/v6e
    for very large batches if desired.
    """
    B, S = x.shape
    H = w1.shape[1]  # 16

    # --- host-side weight prep: pad to lane-dense (128-wide) layouts ---
    w1_p = jnp.zeros((S, LANES), jnp.float32).at[:, :H].set(w1.astype(jnp.float32))
    b1_p = jnp.zeros((1, LANES), jnp.float32).at[:, :H].set(
        b1.astype(jnp.float32).reshape(1, H))
    w2_row = jnp.zeros((1, LANES), jnp.float32).at[:, :H].set(
        w2.astype(jnp.float32).reshape(1, H))
    b2_2d = b2.astype(jnp.float32).reshape(1, 1)

    # --- batch tiling: TB multiple of 8, pad B up to a multiple of TB ---
    TB = max(8, (min(tb, B) // 8) * 8)
    num_tiles = pl.cdiv(B, TB)
    B_pad = num_tiles * TB
    if B_pad != B:
        x = jnp.pad(x, ((0, B_pad - B), (0, 0)))

    out = pl.pallas_call(
        critic_kernel,
        out_shape=jax.ShapeDtypeStruct((B_pad, 1), jnp.float32),
        grid_spec=pltpu.PrefetchScalarGridSpec(
            num_scalar_prefetch=0,
            grid=(num_tiles,),
            in_specs=[
                # x: streamed batch tiles (double-buffered by the pipeline)
                pl.BlockSpec((TB, S), lambda i: (i, 0)),
                # weights/biases: constant block index -> resident across steps
                pl.BlockSpec((S, LANES), lambda i: (0, 0)),
                pl.BlockSpec((1, LANES), lambda i: (0, 0)),
                pl.BlockSpec((1, LANES), lambda i: (0, 0)),
                pl.BlockSpec((1, 1), lambda i: (0, 0)),
            ],
            out_specs=pl.BlockSpec((TB, 1), lambda i: (i, 0)),
        ),
        compiler_params=pltpu.CompilerParams(
            # batch tiles are independent -> shard across TCs on v7x
            dimension_semantics=("parallel",),
            vmem_limit_bytes=32 * 1024 * 1024,
        ),
    )(x, w1_p, b1_p, w2_row, b2_2d)

    return out[:B]


def init_critic_params(key, state_size):
    """Deterministic init mimicking torch.nn.Linear defaults
    (uniform +/- 1/sqrt(fan_in)); weights kept in (in, out) layout."""
    k1, k2, k3, k4 = jax.random.split(key, 4)
    bound1 = 1.0 / jnp.sqrt(jnp.float32(state_size))
    w1 = jax.random.uniform(k1, (state_size, 16), jnp.float32, -bound1, bound1)
    b1 = jax.random.uniform(k2, (16,), jnp.float32, -bound1, bound1)
    bound2 = 1.0 / jnp.sqrt(jnp.float32(16))
    w2 = jax.random.uniform(k3, (16, 1), jnp.float32, -bound2, bound2)
    b2 = jax.random.uniform(k4, (1,), jnp.float32, -bound2, bound2)
    return w1, b1, w2, b2


if __name__ == "__main__":
    key = jax.random.PRNGKey(0)
    kx, kp = jax.random.split(key)

    batch, state_size = 8, 32
    x = jax.random.normal(kx, (batch, state_size), jnp.float32)
    w1, b1, w2, b2 = init_critic_params(kp, state_size)

    out = critic_forward(x, w1, b1, w2, b2)
    out = jax.block_until_ready(out)

    # Pure-JAX reference check of the forward semantics.
    ref = jnp.maximum(x @ w1 + b1, 0.0) @ w2 + b2
    assert out.shape == (batch, 1)
    assert jnp.allclose(out, ref, atol=1e-5, rtol=1e-5)

    # Also exercise a batch that is not a multiple of the tile size.
    batch2 = 2000
    x2 = jax.random.normal(kx, (batch2, state_size), jnp.float32)
    out2 = jax.block_until_ready(critic_forward(x2, w1, b1, w2, b2))
    ref2 = jnp.maximum(x2 @ w1 + b1, 0.0) @ w2 + b2
    assert out2.shape == (batch2, 1)
    assert jnp.allclose(out2, ref2, atol=1e-5, rtol=1e-5)

    print("KERNEL_OK")
</pallas_src>

<mosaic_0001>
module attributes {stable_mosaic.version = 11 : i64} {
  func.func @critic_kernel(%arg0: i32, %arg1: memref<8x32xf32, #tpu.memory_space<vmem>>, %arg2: memref<32x128xf32, #tpu.memory_space<vmem>>, %arg3: memref<1x128xf32, #tpu.memory_space<vmem>>, %arg4: memref<1x128xf32, #tpu.memory_space<vmem>>, %arg5: memref<1x1xf32, #tpu.memory_space<vmem>>, %arg6: memref<8x1xf32, #tpu.memory_space<vmem>>) attributes {dimension_semantics = [#tpu.dimension_semantics<parallel>], iteration_bounds = array<i64: 1>, scalar_prefetch = 0 : i64, scratch_operands = 0 : i64, tpu.core_type = #tpu.core_type<tc>, window_params = [{transform_indices = @transform_0, window_bounds = array<i64: 8, 32>}, {pipeline_mode = #tpu.pipeline_mode<synchronous>, transform_indices = @transform_1, window_bounds = array<i64: 32, 128>}, {pipeline_mode = #tpu.pipeline_mode<synchronous>, transform_indices = @transform_2, window_bounds = array<i64: 1, 128>}, {pipeline_mode = #tpu.pipeline_mode<synchronous>, transform_indices = @transform_3, window_bounds = array<i64: 1, 128>}, {pipeline_mode = #tpu.pipeline_mode<synchronous>, transform_indices = @transform_4, window_bounds = array<i64: 1, 1>}, {transform_indices = @transform_5, window_bounds = array<i64: 8, 1>}]} {
    %c0 = arith.constant 0 : index
    %c0_0 = arith.constant 0 : index
    %0 = vector.load %arg1[%c0, %c0_0] : memref<8x32xf32, #tpu.memory_space<vmem>>, vector<8x32xf32>
    %c0_1 = arith.constant 0 : index
    %c0_2 = arith.constant 0 : index
    %1 = vector.load %arg2[%c0_1, %c0_2] : memref<32x128xf32, #tpu.memory_space<vmem>>, vector<32x128xf32>
    %cst = arith.constant dense<0.000000e+00> : vector<8x128xf32>
    %2 = tpu.matmul %0, %1, %cst {dimension_numbers = #tpu.dot_dimension_numbers<[1], [0], [0], [1], [0, 0, 1, 1], [], []>} : vector<8x32xf32>, vector<32x128xf32>, vector<8x128xf32> -> vector<8x128xf32>
    %c0_3 = arith.constant 0 : index
    %c0_4 = arith.constant 0 : index
    %3 = vector.load %arg3[%c0_3, %c0_4] : memref<1x128xf32, #tpu.memory_space<vmem>>, vector<1x128xf32>
    %4 = vector.broadcast %3 : vector<1x128xf32> to vector<8x128xf32>
    %5 = arith.addf %2, %4 : vector<8x128xf32>
    %cst_5 = arith.constant 0.000000e+00 : f32
    %6 = vector.broadcast %cst_5 : f32 to vector<8x128xf32>
    %7 = arith.maximumf %5, %6 : vector<8x128xf32>
    %c0_6 = arith.constant 0 : index
    %c0_7 = arith.constant 0 : index
    %8 = vector.load %arg4[%c0_6, %c0_7] : memref<1x128xf32, #tpu.memory_space<vmem>>, vector<1x128xf32>
    %9 = vector.broadcast %8 : vector<1x128xf32> to vector<8x128xf32>
    %10 = arith.mulf %7, %9 : vector<8x128xf32>
    %cst_8 = arith.constant dense<0.000000e+00> : vector<8xf32>
    %11 = vector.multi_reduction <add>, %10, %cst_8 [1] : vector<8x128xf32> to vector<8xf32>
    %12 = vector.shape_cast %11 : vector<8xf32> to vector<8x1xf32>
    %c0_9 = arith.constant 0 : index
    %c0_10 = arith.constant 0 : index
    %13 = vector.load %arg5[%c0_9, %c0_10] : memref<1x1xf32, #tpu.memory_space<vmem>>, vector<1x1xf32>
    %14 = vector.broadcast %13 : vector<1x1xf32> to vector<8x1xf32>
    %15 = arith.addf %12, %14 : vector<8x1xf32>
    %c0_11 = arith.constant 0 : index
    %c0_12 = arith.constant 0 : index
    %16 = vector.load %arg6[%c0_11, %c0_12] : memref<8x1xf32, #tpu.memory_space<vmem>>, vector<8x1xf32>
    tpu.vector_store %arg6[%c0_11, %c0_12], %15 {strides = array<i32>} : memref<8x1xf32, #tpu.memory_space<vmem>>, vector<8x1xf32>,
    return
  }
  func.func @transform_0(%arg0: i32) -> (i32, i32) {
    %c0_i32 = arith.constant 0 : i32
    %c0_i32_0 = arith.constant 0 : i32
    return %arg0, %c0_i32 : i32, i32
  }
  func.func @transform_1(%arg0: i32) -> (i32, i32) {
    %c0_i32 = arith.constant 0 : i32
    %c0_i32_0 = arith.constant 0 : i32
    %c0_i32_1 = arith.constant 0 : i32
    return %c0_i32, %c0_i32_0 : i32, i32
  }
  func.func @transform_2(%arg0: i32) -> (i32, i32) {
    %c0_i32 = arith.constant 0 : i32
    %c0_i32_0 = arith.constant 0 : i32
    %c0_i32_1 = arith.constant 0 : i32
    return %c0_i32, %c0_i32_0 : i32, i32
  }
  func.func @transform_3(%arg0: i32) -> (i32, i32) {
    %c0_i32 = arith.constant 0 : i32
    %c0_i32_0 = arith.constant 0 : i32
    %c0_i32_1 = arith.constant 0 : i32
    return %c0_i32, %c0_i32_0 : i32, i32
  }
  func.func @transform_4(%arg0: i32) -> (i32, i32) {
    %c0_i32 = arith.constant 0 : i32
    %c0_i32_0 = arith.constant 0 : i32
    %c0_i32_1 = arith.constant 0 : i32
    return %c0_i32, %c0_i32_0 : i32, i32
  }
  func.func @transform_5(%arg0: i32) -> (i32, i32) {
    %c0_i32 = arith.constant 0 : i32
    %c0_i32_0 = arith.constant 0 : i32
    return %arg0, %c0_i32 : i32, i32
  }
}

</mosaic_0001>

<llo_original>
// kernel: tpu_custom_call.1
$region0: #{tpu_custom_call.1}
  #allocation0 [shape = 'u32[]', space=smem, size = 0x4, offset = 0x4, fixed_abs, tag = 'smem constant byte address 0x4 - core index']
  #allocation1 [shape = 'u32[144,128]{1,0:T(1,128)}', space=vmem, size = 0x12000, scoped, tag = 'internal scratch']
  #allocation2 [shape = 'f32[1,1]{1,0:T(1,128)S(1)}', space=vmem, size = 0x200, scoped, tag = 'scoped memory for tpu_custom_call.1']
  %s0 = inlined_call_operand.hbm [shape: f32[8,32], index: 0, kind: input, shape index: {}]
  %s1 = inlined_call_operand.hbm [shape: f32[32,128], index: 1, kind: input, shape index: {}]
  %s2 = inlined_call_operand.vmem [shape: f32[1,128], index: 2, kind: input, shape index: {}]
  %s3 = inlined_call_operand.vmem [shape: f32[1,128], index: 3, kind: input, shape index: {}]
  %s4 = inlined_call_operand.<no memory space> [shape: f32[1,1], index: 4, kind: input, shape index: {}]
  %s5 = inlined_call_operand.vmem [shape: f32[8,1], index: 5, kind: output, shape index: {}]
  %s6 = sld [smem:[#allocation0]]
  $region38: #{tpu_custom_call.1} parent=0
    _
  %s8 = ssub.s32 1, %s6
  %s9 = scalar_select 0, %s8, %s6
  %v10 = vstv %s4
  %11 = vst [vmem:[#allocation2] sm:$0x1] %v10
  $region1: #{tpu_custom_call.1} parent=0
    #allocation3 [shape = 'u8[4096]{0}', space=vmem, size = 0x1000, scoped, tag = 'input window, operand 0, single buffered']
    #allocation4 [shape = 's32[1]{0}', space=sflag, size = 0x4, scoped, tag = 'scoped memory for tpu_custom_call.1']
    #allocation5 [shape = 'u8[16384]{0}', space=vmem, size = 0x4000, scoped, tag = 'input window, operand 1, single buffered']
    #allocation6 [shape = 's32[1]{0}', space=sflag, size = 0x4, scoped, tag = 'scoped memory for tpu_custom_call.1']
    %12 = vsyncpa [#allocation4], 0
    %13 = vsyncpa [#allocation6], 0
    // Predicated region
    $region2: #{tpu_custom_call.1} parent=1 // pred_check
      _
    $region3: #{tpu_custom_call.1} parent=1 // pred_check_branch
      %15 = sbr.rel (0) target = $region5
    $region4: #{tpu_custom_call.1} parent=1 // pred_region
      %s17 = ssub.s32 128, 128
      %18 = vsyncadd [#allocation4], %s17
      %s20 = sshll.u32 [#allocation3], 4
      %s21 = int_to_ptr.vmem [resolvable:$true] %s20
      %23 = dma.hbm_to_vmem [thread:$0]  %s0, 128, %s21, [#allocation4]
    $region5: #{tpu_custom_call.1} parent=1 // pred_fallthru
      _
    // Predicated region
    $region6: #{tpu_custom_call.1} parent=1 // pred_check
      _
    $region7: #{tpu_custom_call.1} parent=1 // pred_check_branch
      %25 = sbr.rel (0) target = $region9
    $region8: #{tpu_custom_call.1} parent=1 // pred_region
      %s27 = ssub.s32 512, 512
      %28 = vsyncadd [#allocation6], %s27
      %s29 = sshll.u32 [#allocation5], 4
      %s30 = int_to_ptr.vmem [resolvable:$true] %s29
      %35 = dma.hbm_to_vmem [thread:$0]  %s1, 512, %s30, [#allocation6], 128, 128, 8
    $region9: #{tpu_custom_call.1} parent=1 // pred_fallthru
      _
    // Predicated region
    $region10: #{tpu_custom_call.1} parent=1 // pred_check
      _
    $region11: #{tpu_custom_call.1} parent=1 // pred_check_branch
      %37 = sbr.rel (0) target = $region13
    $region12: #{tpu_custom_call.1} parent=1 // pred_region
      _
    $region13: #{tpu_custom_call.1} parent=1 // pred_fallthru
      _
    // Predicated region
    $region14: #{tpu_custom_call.1} parent=1 // pred_check
      _
    $region15: #{tpu_custom_call.1} parent=1 // pred_check_branch
      %39 = sbr.rel (0) target = $region17
    $region16: #{tpu_custom_call.1} parent=1 // pred_region
      _
    $region17: #{tpu_custom_call.1} parent=1 // pred_fallthru
      _
    // Predicated region
    $region18: #{tpu_custom_call.1} parent=1 // pred_check
      _
    $region19: #{tpu_custom_call.1} parent=1 // pred_check_branch
      %41 = sbr.rel (0) target = $region21
    $region20: #{tpu_custom_call.1} parent=1 // pred_region
      _
    $region21: #{tpu_custom_call.1} parent=1 // pred_fallthru
      _
    // Predicated region
    $region22: #{tpu_custom_call.1} parent=1 // pred_check
      _
    $region23: #{tpu_custom_call.1} parent=1 // pred_check_branch
      %43 = sbr.rel (0) target = $region25
    $region24: #{tpu_custom_call.1} parent=1 // pred_region
      %44 = dma.done [#allocation4], 128
    $region25: #{tpu_custom_call.1} parent=1 // pred_fallthru
      _
    // Predicated region
    $region26: #{tpu_custom_call.1} parent=1 // pred_check
      _
    $region27: #{tpu_custom_call.1} parent=1 // pred_check_branch
      %46 = sbr.rel (0) target = $region29
    $region28: #{tpu_custom_call.1} parent=1 // pred_region
      %47 = dma.done [#allocation6], 512
    $region29: #{tpu_custom_call.1} parent=1 // pred_fallthru
      _
    %v48 = vld [vmem:[#allocation3] sm:$0xff]
    %v49 = vld [vmem:[#allocation5] sm:$0xff]
    %v50 = vld [vmem:[#allocation5 + $0x8] sm:$0xff]
    %v51 = vld [vmem:[#allocation5 + $0x10] sm:$0xff]
    %v52 = vld [vmem:[#allocation5 + $0x18] sm:$0xff]
    %v53 = vld [vmem:[%s2] sm:$0x1]
    %v55 = vlaneseq
    %v56 = vshrl.u32 %v55, 7
    %v57 = vsub.s32 0, %v56
    %v58 = vrot.slane %v53, %v57
    %vm60 = vcmask 261120
    %v62 = vsel %vm60, %v48, 0
    %64 = vmatprep.subr.mxu0 0.0
    %65 = vmatpush1.msra.mxu0 %v49
    %66 = vmatprep.subr.mxu0 0.0
    %67 = vmatpush1.msra.mxu0 %v50
    %68 = vmatprep.subr.mxu0 0.0
    %69 = vmatpush1.msra.mxu0 %v51
    %70 = vmatprep.subr.mxu0 0.0
    %71 = vmatpush1.msra.mxu0 %v52
    %72 = vmatprep.subr.mxu0 0.0
    %73 = vmatpush1.msra.mxu0 0.0
    %74 = vmatprep.subr.mxu0 0.0
    %75 = vmatpush1.msra.mxu0 0.0
    %76 = vmatprep.subr.mxu0 0.0
    %77 = vmatpush1.msra.mxu0 0.0
    %78 = vmatprep.subr.mxu0 0.0
    %79 = vmatpush1.msra.mxu0 0.0
    %80 = vmatprep.subr.mxu0 0.0
    %81 = vmatpush1.msra.mxu0 0.0
    %82 = vmatprep.subr.mxu0 0.0
    %83 = vmatpush1.msra.mxu0 0.0
    %84 = vmatprep.subr.mxu0 0.0
    %85 = vmatpush1.msra.mxu0 0.0
    %86 = vmatprep.subr.mxu0 0.0
    %87 = vmatpush1.msra.mxu0 0.0
    %88 = vmatprep.subr.mxu0 0.0
    %89 = vmatpush1.msra.mxu0 0.0
    %90 = vmatprep.subr.mxu0 0.0
    %91 = vmatpush1.msra.mxu0 0.0
    %92 = vmatprep.subr.mxu0 0.0
    %93 = vmatpush1.msra.mxu0 0.0
    %94 = vmatprep.subr.mxu0 0.0
    %95 = vmatpush1.msra.mxu0 0.0
    %96 = vmatprep.subr.mxu0 0.0
    %97 = vmatpush1.msra.mxu0 0.0
    %98 = vmatprep.subr.mxu0 0.0
    %99 = vmatpush1.msra.mxu0 0.0
    %100 = vmatprep.subr.mxu0 0.0
    %101 = vmatpush1.msra.mxu0 0.0
    %102 = vmatprep.subr.mxu0 0.0
    %103 = vmatpush1.msra.mxu0 0.0
    %104 = vmatprep.subr.mxu0 0.0
    %105 = vmatpush1.msra.mxu0 0.0
    %106 = vmatprep.subr.mxu0 0.0
    %107 = vmatpush1.msra.mxu0 0.0
    %108 = vmatprep.subr.mxu0 0.0
    %109 = vmatpush1.msra.mxu0 0.0
    %110 = vmatprep.subr.mxu0 0.0
    %111 = vmatpush1.msra.mxu0 0.0
    %112 = vmatprep.subr.mxu0 0.0
    %113 = vmatpush1.msra.mxu0 0.0
    %114 = vmatprep.subr.mxu0 0.0
    %115 = vmatpush1.msra.mxu0 0.0
    %116 = vmatprep.subr.mxu0 0.0
    %117 = vmatpush1.msra.mxu0 0.0
    %118 = vmatprep.subr.mxu0 0.0
    %119 = vmatpush1.msra.mxu0 0.0
    %120 = vmatprep.subr.mxu0 0.0
    %121 = vmatpush1.msra.mxu0 0.0
    %122 = vmatprep.subr.mxu0 0.0
    %123 = vmatpush1.msra.mxu0 0.0
    %124 = vmatprep.subr.mxu0 0.0
    %125 = vmatpush1.msra.mxu0 0.0
    %126 = vmatprep.subr.mxu0 0.0
    %127 = vmatpush1.msra.mxu0 0.0
    %128 = vmatprep.mubr.f32.mxu0 0.0
    %129 = vmatmul.mubr.f32.gmra.mrb[0].mxu0 %v62
    %v130 = vpop.f32.mrb[0].mxu0
    %v131 = vadd.f32 %v58, %v130
    %v132 = vpop.f32.mrb[0].mxu0
    %133 = vdwg.mxu0
    %v134 = vmax.f32 %v131, 0.0
    %v135 = vld [vmem:[%s3] sm:$0x1]
    %v137 = vlaneseq
    %v138 = vshrl.u32 %v137, 7
    %v139 = vsub.s32 0, %v138
    %v140 = vrot.slane %v135, %v139
    %v142 = vmul.f32 %v134, %v140
    %143 = vadd.xlane.f32.xlu0 %v142
    %v144 = vpop.xlane.xlu0 %143
    %v145 = vld [vmem:[#allocation2] sm:$0x1]
    %v147 = vlaneseq
    %v148 = vshrl.u32 %v147, 7
    %v149 = vsub.s32 0, %v148
    %v150 = vrot.slane %v145, %v149
    %v152 = vadd.f32 %v144, %v150
    %vm153 = vcmask 7168
    %154 = vst.msk [vmem:[%s5] sm:$0xff] %vm153, %v152
    // Predicated region
    $region30: #{tpu_custom_call.1} parent=1 // pred_check
      _
    $region31: #{tpu_custom_call.1} parent=1 // pred_check_branch
      %156 = sbr.rel (0) target = $region33
    $region32: #{tpu_custom_call.1} parent=1 // pred_region
      _
    $region33: #{tpu_custom_call.1} parent=1 // pred_fallthru
      _
    // Predicated region
    $region34: #{tpu_custom_call.1} parent=1 // pred_check
      _
    $region35: #{tpu_custom_call.1} parent=1 // pred_check_branch
      %158 = sbr.rel (0) target = $region37
    $region36: #{tpu_custom_call.1} parent=1 // pred_region
      _
    $region37: #{tpu_custom_call.1} parent=1 // pred_fallthru
      _
    %159 = vsyncpa [#allocation4], 1
    %160 = vsyncpa [#allocation6], 1

</llo_original>
